<compile_context>
chip_gen: v6e
topology: v6e:2x2x1
jax: 0.10.0
libtpu: 0.0.40
codegen_flags: <defaults>
</compile_context>

<pallas_src>
import jax
import jax.numpy as jnp
import numpy as np
from jax import lax
from jax.experimental import pallas as pl
from jax.experimental.pallas import tpu as pltpu

BN_EPS = 1e-5
SPLITS = 2  # leading parallel axis for pass 1 (uses both TCs on v7x)


def _round_up(x, m):
    return (x + m - 1) // m * m


# ---------------- pass 1: Gram-matrix + column-sum statistics ----------------
def _stats_kernel(a_ref, g_ref, cs_ref):
    j = pl.program_id(1)

    @pl.when(j == 0)
    def _init():
        g_ref[...] = jnp.zeros_like(g_ref)
        cs_ref[...] = jnp.zeros_like(cs_ref)

    a = a_ref[...]
    # G += A_tile^T @ A_tile  (contract over the M rows; MXU, f32 accumulation)
    g_ref[...] += lax.dot_general(a, a, (((0,), (0,)), ((), ())),
                                  preferred_element_type=jnp.float32)
    # column sums of A (zero-padded rows contribute exactly 0)
    cs_ref[...] += jnp.sum(a.astype(jnp.float32), axis=0, keepdims=True)


# ------------- pass 2: fused conv matmul + BN affine + ReLU ------------------
def _conv_bn_relu_kernel(a_ref, b_ref, scale_ref, shift_ref, o_ref):
    y = jnp.dot(a_ref[...], b_ref[...], preferred_element_type=jnp.float32)
    o_ref[...] = jnp.maximum(y * scale_ref[...] + shift_ref[...], 0.0)


def basic_conv_forward(x, weight, gamma, beta, *, padding=(1, 0),
                       tile_m=1024, matmul_dtype=jnp.bfloat16,
                       out_layout="NCHW"):
    """x: [N, Cin, H, W] f32 (NCHW); weight: [Cout, Cin, KH, KW]; gamma/beta: [Cout]."""
    N, Cin, H, W = x.shape
    Cout, _, KH, KW = weight.shape
    ph, pw = padding

    # --- glue: pad + im2col in plain JAX -------------------------------------
    # TODO(synk): implicit in-kernel im2col (KH*KW shifted [tile_m,Cin]x[Cin,Cout]
    # matmuls over an NHWC input block) would remove this ~KH*KW x HBM inflation
    # of the input for real-sized feature maps.
    x_pad = jnp.pad(x, ((0, 0), (0, 0), (ph, ph), (pw, pw)))
    Hp, Wp = H + 2 * ph, W + 2 * pw
    Hout, Wout = Hp - KH + 1, Wp - KW + 1

    cols = []
    for kh in range(KH):
        for kw in range(KW):
            cols.append(x_pad[:, :, kh:kh + Hout, kw:kw + Wout])  # [N,Cin,Hout,Wout]
    patches = jnp.stack(cols, axis=2)                   # [N, Cin, KH*KW, Hout, Wout]
    patches = jnp.transpose(patches, (0, 3, 4, 1, 2))   # [N, Hout, Wout, Cin, KH*KW]

    M = N * Hout * Wout
    Kc = Cin * KH * KW                                   # NOT lane-padded in HBM

    # tile_m: multiple of 8, no larger than the per-split share of M.
    tile_m = max(8, min(int(tile_m), _round_up(pl.cdiv(M, SPLITS), 8)))
    M_pad = _round_up(M, tile_m * SPLITS)
    num_tiles = M_pad // tile_m
    tiles_per_split = num_tiles // SPLITS

    A = patches.reshape(M, Kc)
    A = jnp.pad(A, ((0, M_pad - M), (0, 0))).astype(matmul_dtype)

    # weight [Cout, Cin, KH, KW] -> [Kc, Cout] with the same (ci, kh, kw) order.
    B = weight.reshape(Cout, Kc).T
    B_f32 = B.astype(jnp.float32)
    B_mm = B.astype(matmul_dtype)

    itemsize = jnp.dtype(matmul_dtype).itemsize

    # --- pass 1: Gram + column-sum statistics (A read once, tiny outputs) ----
    flops1 = 2 * M_pad * Kc * Kc + 2 * M_pad * Kc
    bytes1 = int(M_pad * Kc * itemsize + SPLITS * (Kc * Kc + Kc) * 4)
    g_parts, cs_parts = pl.pallas_call(
        _stats_kernel,
        out_shape=(jax.ShapeDtypeStruct((SPLITS, Kc, Kc), jnp.float32),
                   jax.ShapeDtypeStruct((SPLITS, 1, Kc), jnp.float32)),
        grid=(SPLITS, tiles_per_split),
        in_specs=[
            pl.BlockSpec((tile_m, Kc),
                         lambda s, j: (s * tiles_per_split + j, 0)),
        ],
        out_specs=(
            pl.BlockSpec((None, Kc, Kc), lambda s, j: (s, 0, 0)),  # per-split partial
            pl.BlockSpec((None, 1, Kc), lambda s, j: (s, 0, 0)),   # per-split partial
        ),
        compiler_params=pltpu.CompilerParams(
            dimension_semantics=("parallel", "arbitrary")),
        cost_estimate=pl.CostEstimate(flops=flops1, transcendentals=0,
                                      bytes_accessed=bytes1),
    )(A)

    # --- glue: fold BN (training-mode batch stats) into scale/shift ----------
    g = jnp.sum(g_parts, axis=0)                    # (Kc, Kc)
    colsum = jnp.sum(cs_parts, axis=(0, 1))         # (Kc,)
    ch_sum = colsum @ B_f32                         # (Cout,)   sum_m y[m, c]
    ch_ssq = jnp.sum(B_f32 * (g @ B_f32), axis=0)   # (Cout,)   sum_m y[m, c]^2
    mean = ch_sum / M
    # TODO(synk): E[x^2]-E[x]^2 can cancel when |mean| >> std; fine at this scale.
    var = ch_ssq / M - mean * mean                  # biased (training-mode) variance
    scale = gamma.astype(jnp.float32) * lax.rsqrt(var + BN_EPS)
    shift = beta.astype(jnp.float32) - mean * scale
    scale2 = scale.reshape(1, Cout)
    shift2 = shift.reshape(1, Cout)

    # --- pass 2: fused conv matmul + BN affine + ReLU (single output write) --
    flops2 = 2 * M_pad * Kc * Cout + 3 * M_pad * Cout
    bytes2 = int(M_pad * Kc * itemsize + Kc * Cout * itemsize
                 + M_pad * Cout * 4 + 2 * Cout * 4)
    out_flat = pl.pallas_call(
        _conv_bn_relu_kernel,
        out_shape=jax.ShapeDtypeStruct((M_pad, Cout), jnp.float32),
        grid=(num_tiles,),
        in_specs=[
            pl.BlockSpec((tile_m, Kc), lambda i: (i, 0)),
            pl.BlockSpec((Kc, Cout), lambda i: (0, 0)),
            pl.BlockSpec((1, Cout), lambda i: (0, 0)),
            pl.BlockSpec((1, Cout), lambda i: (0, 0)),
        ],
        out_specs=pl.BlockSpec((tile_m, Cout), lambda i: (i, 0)),
        compiler_params=pltpu.CompilerParams(
            dimension_semantics=("parallel",)),      # shards across TCs on v7x
        cost_estimate=pl.CostEstimate(flops=flops2, transcendentals=0,
                                      bytes_accessed=bytes2),
    )(A, B_mm, scale2, shift2)

    out = out_flat[:M].reshape(N, Hout, Wout, Cout)
    if out_layout == "NHWC":
        return out                                   # avoids the extra HBM transpose pass
    return jnp.transpose(out, (0, 3, 1, 2))          # NCHW, PyTorch module semantics


def reference_forward(x, weight, gamma, beta, *, padding=(1, 0)):
    """Pure-JAX reference with identical semantics (for verification)."""
    y = lax.conv_general_dilated(
        x.astype(jnp.float32), weight.astype(jnp.float32),
        window_strides=(1, 1),
        padding=[(padding[0], padding[0]), (padding[1], padding[1])],
        dimension_numbers=("NCHW", "OIHW", "NCHW"),
        precision=lax.Precision.HIGHEST)
    mean = jnp.mean(y, axis=(0, 2, 3), keepdims=True)
    var = jnp.mean((y - mean) ** 2, axis=(0, 2, 3), keepdims=True)
    y = (y - mean) * lax.rsqrt(var + BN_EPS)
    y = y * gamma.reshape(1, -1, 1, 1) + beta.reshape(1, -1, 1, 1)
    return jnp.maximum(y, 0.0)


if __name__ == "__main__":
    # in_planes=4, out_planes=8, kernel_size=3, stride=1, padding=(1, 0),
    # bias=False, bn=True, relu=True.
    N, Cin, H, W = 2, 4, 16, 16
    Cout, K = 8, 3

    key = jax.random.PRNGKey(0)
    kx, kw, kg, kb = jax.random.split(key, 4)
    x = jax.random.normal(kx, (N, Cin, H, W), dtype=jnp.float32)
    fan_in = Cin * K * K
    bound = 1.0 / np.sqrt(fan_in)
    weight = jax.random.uniform(kw, (Cout, Cin, K, K), dtype=jnp.float32,
                                minval=-bound, maxval=bound)
    gamma = 1.0 + 0.1 * jax.random.normal(kg, (Cout,), dtype=jnp.float32)
    beta = 0.1 * jax.random.normal(kb, (Cout,), dtype=jnp.float32)

    ref = jax.block_until_ready(reference_forward(x, weight, gamma, beta))

    # 1) f32-operand path: tight-ish tolerance vs. the f32 reference.
    out_f32 = jax.block_until_ready(
        basic_conv_forward(x, weight, gamma, beta, matmul_dtype=jnp.float32))
    assert out_f32.shape == (N, Cout, H, W - 2), out_f32.shape
    np.testing.assert_allclose(np.asarray(out_f32), np.asarray(ref),
                               atol=5e-4, rtol=5e-4)

    # 2) default bf16-operand path (perf): compare against a reference whose
    #    inputs are rounded to bf16 the same way (f32 accumulation in both).
    x_r = x.astype(jnp.bfloat16).astype(jnp.float32)
    w_r = weight.astype(jnp.bfloat16).astype(jnp.float32)
    ref_bf16 = jax.block_until_ready(reference_forward(x_r, w_r, gamma, beta))
    out_bf16 = jax.block_until_ready(basic_conv_forward(x, weight, gamma, beta))
    assert out_bf16.shape == (N, Cout, H, W - 2), out_bf16.shape
    np.testing.assert_allclose(np.asarray(out_bf16), np.asarray(ref_bf16),
                               atol=2e-3, rtol=2e-3)

    print("KERNEL_OK")
</pallas_src>

<mosaic_0001>
module attributes {stable_mosaic.version = 11 : i64} {
  func.func @_stats_kernel(%arg0: i32, %arg1: i32, %arg2: memref<224x36xf32, #tpu.memory_space<vmem>>, %arg3: memref<1x36x36xf32, #tpu.memory_space<vmem>>, %arg4: memref<1x1x36xf32, #tpu.memory_space<vmem>>) attributes {dimension_semantics = [#tpu.dimension_semantics<parallel>, #tpu.dimension_semantics<arbitrary>], iteration_bounds = array<i64: 2, 1>, scalar_prefetch = 0 : i64, scratch_operands = 0 : i64, tpu.core_type = #tpu.core_type<tc>, window_params = [{transform_indices = @transform_0, window_bounds = array<i64: 224, 36>}, {transform_indices = @transform_1, window_bounds = array<i64: 1, 36, 36>}, {transform_indices = @transform_2, window_bounds = array<i64: 1, 1, 36>}]} {
    %c0_i32 = arith.constant 0 : i32
    %0 = arith.cmpi eq, %arg1, %c0_i32 : i32
    %1 = arith.extui %0 : i1 to i32
    %c0_i32_0 = arith.constant 0 : i32
    %2 = arith.cmpi ne, %1, %c0_i32_0 : i32
    scf.if %2 {
      %cst_15 = arith.constant 0.000000e+00 : f32
      %19 = vector.broadcast %cst_15 : f32 to vector<36x36xf32>
      %c0_16 = arith.constant 0 : index
      %c0_17 = arith.constant 0 : index
      %c0_18 = arith.constant 0 : index
      %20 = vector.load %arg3[%c0_16, %c0_17, %c0_18] : memref<1x36x36xf32, #tpu.memory_space<vmem>>, vector<1x36x36xf32>
      %21 = vector.shape_cast %20 : vector<1x36x36xf32> to vector<36x36xf32>
      %22 = vector.shape_cast %19 : vector<36x36xf32> to vector<1x36x36xf32>
      tpu.vector_store %arg3[%c0_16, %c0_17, %c0_18], %22 {strides = array<i32>} : memref<1x36x36xf32, #tpu.memory_space<vmem>>, vector<1x36x36xf32>,
      %cst_19 = arith.constant 0.000000e+00 : f32
      %23 = vector.broadcast %cst_19 : f32 to vector<1x36xf32>
      %c0_20 = arith.constant 0 : index
      %c0_21 = arith.constant 0 : index
      %c0_22 = arith.constant 0 : index
      %24 = vector.load %arg4[%c0_20, %c0_21, %c0_22] : memref<1x1x36xf32, #tpu.memory_space<vmem>>, vector<1x1x36xf32>
      %25 = vector.shape_cast %24 : vector<1x1x36xf32> to vector<1x36xf32>
      %26 = vector.shape_cast %23 : vector<1x36xf32> to vector<1x1x36xf32>
      tpu.vector_store %arg4[%c0_20, %c0_21, %c0_22], %26 {strides = array<i32>} : memref<1x1x36xf32, #tpu.memory_space<vmem>>, vector<1x1x36xf32>,
    } else {
    }
    %c0 = arith.constant 0 : index
    %c0_1 = arith.constant 0 : index
    %3 = vector.load %arg2[%c0, %c0_1] : memref<224x36xf32, #tpu.memory_space<vmem>>, vector<224x36xf32>
    %c0_2 = arith.constant 0 : index
    %c0_3 = arith.constant 0 : index
    %c0_4 = arith.constant 0 : index
    %4 = vector.load %arg3[%c0_2, %c0_3, %c0_4] : memref<1x36x36xf32, #tpu.memory_space<vmem>>, vector<1x36x36xf32>
    %5 = vector.shape_cast %4 : vector<1x36x36xf32> to vector<36x36xf32>
    %cst = arith.constant dense<0.000000e+00> : vector<36x36xf32>
    %6 = tpu.matmul %3, %3, %cst {dimension_numbers = #tpu.dot_dimension_numbers<[0], [0], [1], [1], [0, 1, 1, 1], [], []>} : vector<224x36xf32>, vector<224x36xf32>, vector<36x36xf32> -> vector<36x36xf32>
    %7 = arith.addf %5, %6 : vector<36x36xf32>
    %c0_5 = arith.constant 0 : index
    %c0_6 = arith.constant 0 : index
    %c0_7 = arith.constant 0 : index
    %8 = vector.load %arg3[%c0_5, %c0_6, %c0_7] : memref<1x36x36xf32, #tpu.memory_space<vmem>>, vector<1x36x36xf32>
    %9 = vector.shape_cast %8 : vector<1x36x36xf32> to vector<36x36xf32>
    %10 = vector.shape_cast %7 : vector<36x36xf32> to vector<1x36x36xf32>
    tpu.vector_store %arg3[%c0_5, %c0_6, %c0_7], %10 {strides = array<i32>} : memref<1x36x36xf32, #tpu.memory_space<vmem>>, vector<1x36x36xf32>,
    %c0_8 = arith.constant 0 : index
    %c0_9 = arith.constant 0 : index
    %c0_10 = arith.constant 0 : index
    %11 = vector.load %arg4[%c0_8, %c0_9, %c0_10] : memref<1x1x36xf32, #tpu.memory_space<vmem>>, vector<1x1x36xf32>
    %12 = vector.shape_cast %11 : vector<1x1x36xf32> to vector<1x36xf32>
    %cst_11 = arith.constant dense<0.000000e+00> : vector<36xf32>
    %13 = vector.multi_reduction <add>, %3, %cst_11 [0] : vector<224x36xf32> to vector<36xf32>
    %14 = vector.shape_cast %13 : vector<36xf32> to vector<1x36xf32>
    %15 = arith.addf %12, %14 : vector<1x36xf32>
    %c0_12 = arith.constant 0 : index
    %c0_13 = arith.constant 0 : index
    %c0_14 = arith.constant 0 : index
    %16 = vector.load %arg4[%c0_12, %c0_13, %c0_14] : memref<1x1x36xf32, #tpu.memory_space<vmem>>, vector<1x1x36xf32>
    %17 = vector.shape_cast %16 : vector<1x1x36xf32> to vector<1x36xf32>
    %18 = vector.shape_cast %15 : vector<1x36xf32> to vector<1x1x36xf32>
    tpu.vector_store %arg4[%c0_12, %c0_13, %c0_14], %18 {strides = array<i32>} : memref<1x1x36xf32, #tpu.memory_space<vmem>>, vector<1x1x36xf32>,
    return
  }
  func.func @transform_0(%arg0: i32, %arg1: i32) -> (i32, i32) {
    %c1_i32 = arith.constant 1 : i32
    %0 = arith.muli %arg0, %c1_i32 : i32
    %1 = arith.addi %0, %arg1 : i32
    %c0_i32 = arith.constant 0 : i32
    %c0_i32_0 = arith.constant 0 : i32
    return %1, %c0_i32 : i32, i32
  }
  func.func @transform_1(%arg0: i32, %arg1: i32) -> (i32, i32, i32) {
    %c0_i32 = arith.constant 0 : i32
    %c0_i32_0 = arith.constant 0 : i32
    %c0_i32_1 = arith.constant 0 : i32
    return %arg0, %c0_i32, %c0_i32_0 : i32, i32, i32
  }
  func.func @transform_2(%arg0: i32, %arg1: i32) -> (i32, i32, i32) {
    %c0_i32 = arith.constant 0 : i32
    %c0_i32_0 = arith.constant 0 : i32
    %c0_i32_1 = arith.constant 0 : i32
    return %arg0, %c0_i32, %c0_i32_0 : i32, i32, i32
  }
}

</mosaic_0001>

<llo_original>
// kernel: tpu_custom_call.1
$region0: #{tpu_custom_call.1}
  #allocation0 [shape = 'u32[]', space=smem, size = 0x4, offset = 0x4, fixed_abs, tag = 'smem constant byte address 0x4 - core index']
  #allocation1 [shape = 'u32[144,128]{1,0:T(1,128)}', space=vmem, size = 0x12000, scoped, tag = 'internal scratch']
  %s0 = inlined_call_operand.vmem [shape: f32[448,36], index: 0, kind: input, shape index: {}]
  %s1 = inlined_call_operand.vmem [shape: f32[2,36,36], index: 1, kind: output, shape index: {0}]
  %s2 = inlined_call_operand.hbm [shape: f32[2,1,36], index: 2, kind: output, shape index: {1}]
  %3 = xla_tuple %s1, %s2
  %s4 = sld [smem:[#allocation0]]
  $region49: #{tpu_custom_call.1} parent=0
    _
  %s6 = ssub.s32 1, %s4
  %s7 = scalar_select 0, %s6, %s4
  $region1: #{tpu_custom_call.1} parent=0
    #allocation2 [shape = 'u8[1024]{0}', space=vmem, size = 0x400, scoped, tag = 'output window, operand 1']
    #allocation3 [shape = 's32[2]{0}', space=sflag, size = 0x8, scoped, tag = 'scoped memory for tpu_custom_call.1']
    %8 = vsyncpa [#allocation3], 0
    %s9 = scalar_lea.sflag [#allocation3], 1
    %10 = vsyncpa %s9, 0
    loop: start=0, step=1, limit=4
    $region2: #{tpu_custom_call.1} parent=1 // loop_pre_header
      _
    $region3: #{tpu_custom_call.1} parent=1 // loop_header
      %s12 = sphi 0, %s16
      %p13 = scmp.ge.s32.totalorder %s12, 4
      %s19 = sphi 0, %s31
      %s20 = sphi 0, %s27
      %s21 = sphi 0, %s19
      %s22 = sphi 0, %s20
      %s23 = sphi 0, %s21
      %s24 = sphi 0, %s22
      %s36 = sphi 0, %s38
      %s39 = sphi 0, %s36
      %s40 = sphi 0, %s39
      %s56 = sphi 0, %s40
      %s62 = sphi 0, %s64
      %s65 = sphi 0, %s62
      %s66 = sphi 0, %s65
      %s82 = sphi 0, %s66
      %s88 = sphi 0, %s90
      %s91 = sphi 0, %s88
      %s92 = sphi 0, %s91
      %s108 = sphi 0, %s92
    $region4: #{tpu_custom_call.1} parent=1 // loop_header_branch
      %15 = sbr.rel (%p13) target = $region8
    $region5: #{tpu_custom_call.1} parent=1 // loop_body
      %s17 = ssub.s32 %s12, 1
      %s18 = ssub.s32 %s12, 2
      %s25 = sadd.s32 1, %s20
      %p26 = scmp.ge.s32.totalorder %s25, 1
      %s27 = scalar_select %p26, 0, %s25
      %s28 = sadd.s32 1, %s19
      %s29 = scalar_select %p26, %s28, %s19
      %p30 = scmp.ge.s32.totalorder %s29, 2
      %s31 = scalar_select %p30, 0, %s29
      %s32 = sadd.s32 %s19, %s20
      %s33 = sadd.s32 %s31, %s27
      %s34 = ssub.s32 %s32, %s33
      %p35 = scmp.eq.s32.totalorder %s34, 0
      %s37 = sadd.s32 %s36, 1
      %s38 = scalar_select %p35, %s36, %s37
      %p41 = pneg %p35
      %p42 = scmp.eq.s32.totalorder %s12, 1
      %p43 = por %p41, %p42
      %p44 = scmp.ne.s32.totalorder %s36, %s39
      %p45 = scmp.eq.s32.totalorder %s12, 0
      %p46 = por %p44, %p45
      %p47 = scmp.ne.s32.totalorder %s36, %s39
      %p48 = scmp.eq.s32.totalorder %s17, 1
      %p49 = por %p47, %p48
      %p50 = scmp.ne.s32.totalorder %s39, %s40
      %p51 = scmp.eq.s32.totalorder %s17, 0
      %p52 = por %p50, %p51
      %p53 = scmp.ne.s32.totalorder %s39, %s40
      %p54 = scmp.eq.s32.totalorder %s18, 1
      %p55 = por %p53, %p54
      %p57 = scmp.ne.s32.totalorder %s40, %s56
      %p58 = scmp.eq.s32.totalorder %s18, 0
      %p59 = por %p57, %p58
      %s60 = ssub.s32 %s19, %s31
      %p61 = scmp.eq.s32.totalorder %s60, 0
      %s63 = sadd.s32 %s62, 1
      %s64 = scalar_select %p61, %s62, %s63
      %p67 = pneg %p61
      %p68 = scmp.eq.s32.totalorder %s12, 1
      %p69 = por %p67, %p68
      %p70 = scmp.ne.s32.totalorder %s62, %s65
      %p71 = scmp.eq.s32.totalorder %s12, 0
      %p72 = por %p70, %p71
      %p73 = scmp.ne.s32.totalorder %s62, %s65
      %p74 = scmp.eq.s32.totalorder %s17, 1
      %p75 = por %p73, %p74
      %p76 = scmp.ne.s32.totalorder %s65, %s66
      %p77 = scmp.eq.s32.totalorder %s17, 0
      %p78 = por %p76, %p77
      %p79 = scmp.ne.s32.totalorder %s65, %s66
      %p80 = scmp.eq.s32.totalorder %s18, 1
      %p81 = por %p79, %p80
      %p83 = scmp.ne.s32.totalorder %s66, %s82
      %p84 = scmp.eq.s32.totalorder %s18, 0
      %p85 = por %p83, %p84
      %s86 = ssub.s32 %s19, %s31
      %p87 = scmp.eq.s32.totalorder %s86, 0
      %s89 = sadd.s32 %s88, 1
      %s90 = scalar_select %p87, %s88, %s89
      %p93 = pneg %p87
      %p94 = scmp.eq.s32.totalorder %s12, 1
      %p95 = por %p93, %p94
      %p96 = scmp.ne.s32.totalorder %s88, %s91
      %p97 = scmp.eq.s32.totalorder %s12, 0
      %p98 = por %p96, %p97
      %p99 = scmp.ne.s32.totalorder %s88, %s91
      %p100 = scmp.eq.s32.totalorder %s17, 1
      %p101 = por %p99, %p100
      %p102 = scmp.ne.s32.totalorder %s91, %s92
      %p103 = scmp.eq.s32.totalorder %s17, 0
      %p104 = por %p102, %p103
      %p105 = scmp.ne.s32.totalorder %s91, %s92
      %p106 = scmp.eq.s32.totalorder %s18, 1
      %p107 = por %p105, %p106
      %p109 = scmp.ne.s32.totalorder %s92, %s108
      %p110 = scmp.eq.s32.totalorder %s18, 0
      %p111 = por %p109, %p110
      %p112 = scmp.le.s32.totalorder 1, %s12
      %p113 = scmp.lt.s32.totalorder %s12, 3
      %p114 = pnand %p112, %p113
      %p115 = pneg %p114
      // Predicated region
      $region9: #{tpu_custom_call.1} parent=5 // pred_check
        _
      $region10: #{tpu_custom_call.1} parent=5 // pred_check_branch
        %117 = sbr.rel (%p114) target = $region12
      $region11: #{tpu_custom_call.1} parent=5 // pred_region
        %s118 = ssub.s32 %s12, 1
      $region12: #{tpu_custom_call.1} parent=5 // pred_fallthru
        _
      %p119 = scmp.lt.s32.totalorder %s12, 2
      // Predicated region
      $region13: #{tpu_custom_call.1} parent=5 // pred_check
        %p120 = pneg %p119
      $region14: #{tpu_custom_call.1} parent=5 // pred_check_branch
        %122 = sbr.rel (%p120) target = $region16
      $region15: #{tpu_custom_call.1} parent=5 // pred_region
        // Predicated region
        $region17: #{tpu_custom_call.1} parent=15 // pred_check
          %p123 = pneg %p46
        $region18: #{tpu_custom_call.1} parent=15 // pred_check_branch
          %125 = sbr.rel (%p123) target = $region20
        $region19: #{tpu_custom_call.1} parent=15 // pred_region
          %s126 = sadd.s32 %s19, %s20
          %s127 = smul.u32 28, %s126
          %p128 = scmp.lt.s32.totalorder %s127, 55
          %s129 = scalar_select %p128, %s127, 55
          %s130 = smul.addr %s129, 8
          %s131 = scalar_lea.vmem %s0, %s130
          %s132 = sadd.s32 %s19, %s20
          %s133 = smul.u32 28, %s132
        $region20: #{tpu_custom_call.1} parent=15 // pred_fallthru
          _
      $region16: #{tpu_custom_call.1} parent=5 // pred_fallthru
        _
      %p134 = scmp.le.s32.totalorder 1, %s12
      %p135 = scmp.lt.s32.totalorder %s12, 3
      %p136 = pnand %p134, %p135
      %p137 = pneg %p136
      // Predicated region
      $region21: #{tpu_custom_call.1} parent=5 // pred_check
        _
      $region22: #{tpu_custom_call.1} parent=5 // pred_check_branch
        %139 = sbr.rel (%p136) target = $region24
      $region23: #{tpu_custom_call.1} parent=5 // pred_region
        %s140 = ssub.s32 %s12, 1
        %s141 = sadd.s32 %s21, %s22
        %s142 = smul.u32 28, %s141
        %p143 = scmp.lt.s32.totalorder %s142, 55
        %s144 = scalar_select %p143, %s142, 55
        %s145 = smul.addr %s144, 8
        %s146 = scalar_lea.vmem %s0, %s145
        %p147 = pneg %p52
        %p148 = pneg %p49
        %p149 = pneg %p78
        %p150 = pneg %p75
        %p151 = scmp.lt.s32.totalorder %s21, 1
        %s152 = scalar_select %p151, %s21, 1
        %s153 = smul.addr %s152, 5
        %s154 = smul.addr %s153, 8
        %s155 = scalar_lea.vmem %s1, %s154
        %p156 = pneg %p104
        %p157 = pneg %p101
        %s158 = sand.u32 %s91, 1
        %s159 = scalar_lea.sflag [#allocation3], %s158
        %s160 = sand.u32 %s91, 1
        %s161 = scalar_lea.vmem [#allocation2], %s160
        %s162 = sadd.s32 %s21, %s22
        %s163 = smul.u32 28, %s162
        %p164 = scmp.lt.s32.totalorder %s163, 55
        %s165 = scalar_select %p164, %s163, 55
        %s166 = smul.addr %s165, 8
        %s167 = scalar_lea.vmem %s0, %s166
        %s168 = sadd.s32 %s21, %s22
        %s169 = smul.u32 28, %s168
        %p170 = scmp.lt.s32.totalorder %s21, 1
        %s171 = scalar_select %p170, %s21, 1
        %s172 = smul.addr %s171, 5
        %s173 = smul.addr %s172, 8
        %s174 = scalar_lea.vmem %s1, %s173
        %p175 = scmp.eq.s32.totalorder %s22, 0
        // Predicated region
        $region25: #{tpu_custom_call.1} parent=23 // pred_check
          %p176 = pneg %p175
        $region26: #{tpu_custom_call.1} parent=23 // pred_check_branch
          %178 = sbr.rel (%p176) target = $region28
        $region27: #{tpu_custom_call.1} parent=23 // pred_region
          %vm179 = vcmask 293888
          %180 = vst.msk [vmem:[%s174] sm:$0xff] %vm179, 0.0
          %181 = vst.msk [vmem:[%s174 + $0x8] sm:$0xff] %vm179, 0.0
          %182 = vst.msk [vmem:[%s174 + $0x10] sm:$0xff] %vm179, 0.0
          %183 = vst.msk [vmem:[%s174 + $0x18] sm:$0xff] %vm179, 0.0
          %vm184 = vcmask 289792
          %185 = vst.msk [vmem:[%s174 + $0x20] sm:$0xf] %vm184, 0.0
          %vm186 = vcmask 286720
          %187 = vst.msk [vmem:[%s161] sm:$0x1] %vm186, 0.0
        $region28: #{tpu_custom_call.1} parent=23 // pred_fallthru
          _
        %v188 = vld [vmem:[%s167] sm:$0xff]
        %v189 = vld [vmem:[%s167 + $0x8] sm:$0xff]
        %v190 = vld [vmem:[%s167 + $0x10] sm:$0xff]
        %v191 = vld [vmem:[%s167 + $0x18] sm:$0xff]
        %v192 = vld [vmem:[%s167 + $0x20] sm:$0xff]
        %v193 = vld [vmem:[%s167 + $0x28] sm:$0xff]
        %v194 = vld [vmem:[%s167 + $0x30] sm:$0xff]
        %v195 = vld [vmem:[%s167 + $0x38] sm:$0xff]
        %v196 = vld [vmem:[%s167 + $0x40] sm:$0xff]
        %v197 = vld [vmem:[%s167 + $0x48] sm:$0xff]
        %v198 = vld [vmem:[%s167 + $0x50] sm:$0xff]
        %v199 = vld [vmem:[%s167 + $0x58] sm:$0xff]
        %v200 = vld [vmem:[%s167 + $0x60] sm:$0xff]
        %v201 = vld [vmem:[%s167 + $0x68] sm:$0xff]
        %v202 = vld [vmem:[%s167 + $0x70] sm:$0xff]
        %v203 = vld [vmem:[%s167 + $0x78] sm:$0xff]
        %v204 = vld [vmem:[%s167 + $0x80] sm:$0xff]
        %v205 = vld [vmem:[%s167 + $0x88] sm:$0xff]
        %v206 = vld [vmem:[%s167 + $0x90] sm:$0xff]
        %v207 = vld [vmem:[%s167 + $0x98] sm:$0xff]
        %v208 = vld [vmem:[%s167 + $0xa0] sm:$0xff]
        %v209 = vld [vmem:[%s167 + $0xa8] sm:$0xff]
        %v210 = vld [vmem:[%s167 + $0xb0] sm:$0xff]
        %v211 = vld [vmem:[%s167 + $0xb8] sm:$0xff]
        %v212 = vld [vmem:[%s167 + $0xc0] sm:$0xff]
        %v213 = vld [vmem:[%s167 + $0xc8] sm:$0xff]
        %v214 = vld [vmem:[%s167 + $0xd0] sm:$0xff]
        %v215 = vld [vmem:[%s167 + $0xd8] sm:$0xff]
        %v216 = vld [vmem:[%s174] sm:$0xff]
        %v217 = vld [vmem:[%s174 + $0x8] sm:$0xff]
        %v218 = vld [vmem:[%s174 + $0x10] sm:$0xff]
        %v219 = vld [vmem:[%s174 + $0x18] sm:$0xff]
        %v220 = vld [vmem:[%s174 + $0x20] sm:$0xf]
        %221 = vxpose.xlu0.b32.start [1/16] %v188, 128
        %222 = vxpose.xlu0.b32.cont [2/16] %v189, 128
        %223 = vxpose.xlu0.b32.cont [3/16] %v190, 128
        %224 = vxpose.xlu0.b32.cont [4/16] %v191, 128
        %225 = vxpose.xlu0.b32.cont [5/16] %v192, 128
        %226 = vxpose.xlu0.b32.cont [6/16] %v193, 128
        %227 = vxpose.xlu0.b32.cont [7/16] %v194, 128
        %228 = vxpose.xlu0.b32.cont [8/16] %v195, 128
        %229 = vxpose.xlu0.b32.cont [9/16] %v196, 128
        %230 = vxpose.xlu0.b32.cont [10/16] %v197, 128
        %231 = vxpose.xlu0.b32.cont [11/16] %v198, 128
        %232 = vxpose.xlu0.b32.cont [12/16] %v199, 128
        %233 = vxpose.xlu0.b32.cont [13/16] %v200, 128
        %234 = vxpose.xlu0.b32.cont [14/16] %v201, 128
        %235 = vxpose.xlu0.b32.cont [15/16] %v202, 128
        %236 = vxpose.xlu0.b32.end [16/16] %v203, 128
        %v237 = vpop.trf.xlu0
        %v238 = vpop.trf.xlu0
        %v239 = vpop.trf.xlu0
        %v240 = vpop.trf.xlu0
        %v241 = vpop.trf.xlu0
        %v242 = vpop.trf.xlu0
        %v243 = vpop.trf.xlu0
        %v244 = vpop.trf.xlu0
        %v245 = vpop.trf.xlu0
        %v246 = vpop.trf.xlu0
        %v247 = vpop.trf.xlu0
        %v248 = vpop.trf.xlu0
        %v249 = vpop.trf.xlu0
        %v250 = vpop.trf.xlu0
        %v251 = vpop.trf.xlu0
        %v252 = vpop.trf.xlu0
        %253 = vxpose.xlu0.b32.start [1/16] %v204, 128
        %254 = vxpose.xlu0.b32.cont [2/16] %v205, 128
        %255 = vxpose.xlu0.b32.cont [3/16] %v206, 128
        %256 = vxpose.xlu0.b32.cont [4/16] %v207, 128
        %257 = vxpose.xlu0.b32.cont [5/16] %v208, 128
        %258 = vxpose.xlu0.b32.cont [6/16] %v209, 128
        %259 = vxpose.xlu0.b32.cont [7/16] %v210, 128
        %260 = vxpose.xlu0.b32.cont [8/16] %v211, 128
        %261 = vxpose.xlu0.b32.cont [9/16] %v212, 128
        %262 = vxpose.xlu0.b32.cont [10/16] %v213, 128
        %263 = vxpose.xlu0.b32.cont [11/16] %v214, 128
        %264 = vxpose.xlu0.b32.cont [12/16] %v215, 128
        %265 = vxpose.xlu0.b32.cont [13/16] 0.0, 128
        %266 = vxpose.xlu0.b32.cont [14/16] 0.0, 128
        %267 = vxpose.xlu0.b32.cont [15/16] 0.0, 128
        %268 = vxpose.xlu0.b32.end [16/16] 0.0, 128
        %v269 = vpop.trf.xlu0
        %v270 = vpop.trf.xlu0
        %v271 = vpop.trf.xlu0
        %v272 = vpop.trf.xlu0
        %v273 = vpop.trf.xlu0
        %v274 = vpop.trf.xlu0
        %v275 = vpop.trf.xlu0
        %v276 = vpop.trf.xlu0
        %v277 = vpop.trf.xlu0
        %v278 = vpop.trf.xlu0
        %v279 = vpop.trf.xlu0
        %v280 = vpop.trf.xlu0
        %v281 = vpop.trf.xlu0
        %v282 = vpop.trf.xlu0
        %v283 = vpop.trf.xlu0
        %v284 = vpop.trf.xlu0
        %vm285 = vcmask 785408
        %v287 = vsel %vm285, %v269, 0
        %v290 = vsel %vm285, %v270, 0
        %v293 = vsel %vm285, %v271, 0
        %v296 = vsel %vm285, %v272, 0
        %v299 = vsel %vm285, %v273, 0
        %301 = vmatprep.subr.mxu0 0.0
        %302 = vmatpush1.msra.mxu0 %v203
        %303 = vmatprep.subr.mxu0 0.0
        %304 = vmatpush1.msra.mxu0 %v202
        %305 = vmatprep.subr.mxu0 0.0
        %306 = vmatpush1.msra.mxu0 %v201
        %307 = vmatprep.subr.mxu0 0.0
        %308 = vmatpush1.msra.mxu0 %v200
        %309 = vmatprep.subr.mxu0 0.0
        %310 = vmatpush1.msra.mxu0 %v199
        %311 = vmatprep.subr.mxu0 0.0
        %312 = vmatpush1.msra.mxu0 %v198
        %313 = vmatprep.subr.mxu0 0.0
        %314 = vmatpush1.msra.mxu0 %v197
        %315 = vmatprep.subr.mxu0 0.0
        %316 = vmatpush1.msra.mxu0 %v196
        %317 = vmatprep.subr.mxu0 0.0
        %318 = vmatpush1.msra.mxu0 %v195
        %319 = vmatprep.subr.mxu0 0.0
        %320 = vmatpush1.msra.mxu0 %v194
        %321 = vmatprep.subr.mxu0 0.0
        %322 = vmatpush1.msra.mxu0 %v193
        %323 = vmatprep.subr.mxu0 0.0
        %324 = vmatpush1.msra.mxu0 %v192
        %325 = vmatprep.subr.mxu0 0.0
        %326 = vmatpush1.msra.mxu0 %v191
        %327 = vmatprep.subr.mxu0 0.0
        %328 = vmatpush1.msra.mxu0 %v190
        %329 = vmatprep.subr.mxu0 0.0
        %330 = vmatpush1.msra.mxu0 %v189
        %331 = vmatprep.subr.mxu0 0.0
        %332 = vmatpush1.msra.mxu0 %v188
        %333 = vmatprep.subr.mxu0 0.0
        %334 = vmatpush2.msra.mxu0 0.0
        %335 = vmatprep.subr.mxu0 0.0
        %336 = vmatpush2.msra.mxu0 0.0
        %337 = vmatprep.subr.mxu0 0.0
        %338 = vmatpush2.msra.mxu0 0.0
        %339 = vmatprep.subr.mxu0 0.0
        %340 = vmatpush2.msra.mxu0 0.0
        %341 = vmatprep.subr.mxu0 0.0
        %342 = vmatpush2.msra.mxu0 %v215
        %343 = vmatprep.subr.mxu0 0.0
        %344 = vmatpush2.msra.mxu0 %v214
        %345 = vmatprep.subr.mxu0 0.0
        %346 = vmatpush2.msra.mxu0 %v213
        %347 = vmatprep.subr.mxu0 0.0
        %348 = vmatpush2.msra.mxu0 %v212
        %349 = vmatprep.subr.mxu0 0.0
        %350 = vmatpush2.msra.mxu0 %v211
        %351 = vmatprep.subr.mxu0 0.0
        %352 = vmatpush2.msra.mxu0 %v210
        %353 = vmatprep.subr.mxu0 0.0
        %354 = vmatpush2.msra.mxu0 %v209
        %355 = vmatprep.subr.mxu0 0.0
        %356 = vmatpush2.msra.mxu0 %v208
        %357 = vmatprep.subr.mxu0 0.0
        %358 = vmatpush2.msra.mxu0 %v207
        %359 = vmatprep.subr.mxu0 0.0
        %360 = vmatpush2.msra.mxu0 %v206
        %361 = vmatprep.subr.mxu0 0.0
        %362 = vmatpush2.msra.mxu0 %v205
        %363 = vmatprep.subr.mxu0 0.0
        %364 = vmatpush2.msra.mxu0 %v204
        %365 = vmatprep.mubr.f32.mxu0 %v287
        %366 = vmatmul.mubr.f32.gmra.mxu0 %v237
        %v367 = vpop.f32.mrf.mxu0
        %v368 = vadd.f32 0.0, %v367
        %v369 = vpop.f32.mrf.mxu0
        %370 = vmatprep.mubr.f32.mxu0 %v290
        %371 = vmatmul.mubr.f32.gmra.mxu0 %v238
        %v372 = vpop.f32.mrf.mxu0
        %v373 = vadd.f32 0.0, %v372
        %v374 = vpop.f32.mrf.mxu0
        %375 = vmatprep.mubr.f32.mxu0 %v293
        %376 = vmatmul.mubr.f32.gmra.mxu0 %v239
        %v377 = vpop.f32.mrf.mxu0
        %v378 = vadd.f32 0.0, %v377
        %v379 = vpop.f32.mrf.mxu0
        %380 = vmatprep.mubr.f32.mxu0 %v296
        %381 = vmatmul.mubr.f32.gmra.mxu0 %v240
        %v382 = vpop.f32.mrf.mxu0
        %v383 = vadd.f32 0.0, %v382
        %v384 = vpop.f32.mrf.mxu0
        %385 = vmatprep.mubr.f32.mxu0 %v299
        %386 = vmatmul.mubr.f32.gmra.mxu0 %v241
        %v387 = vpop.f32.mrf.mxu0
        %v388 = vadd.f32 0.0, %v387
        %v389 = vpop.f32.mrf.mxu0
        %390 = vdwg.mxu0
        %v391 = vadd.f32 %v216, %v368
        %v392 = vadd.f32 %v217, %v373
        %v393 = vadd.f32 %v218, %v378
        %v394 = vadd.f32 %v219, %v383
        %v395 = vadd.f32 %v220, %v388
        %vm396 = vcmask 293888
        %397 = vst.msk [vmem:[%s174] sm:$0xff] %vm396, %v391
        %398 = vst.msk [vmem:[%s174 + $0x8] sm:$0xff] %vm396, %v392
        %399 = vst.msk [vmem:[%s174 + $0x10] sm:$0xff] %vm396, %v393
        %400 = vst.msk [vmem:[%s174 + $0x18] sm:$0xff] %vm396, %v394
        %vm401 = vcmask 289792
        %402 = vst.msk [vmem:[%s174 + $0x20] sm:$0xf] %vm401, %v395
        %v403 = vld [vmem:[%s161] sm:$0x1]
        %v404 = vsel %vm396, %v188, 0.0
        %v405 = vsel %vm396, %v189, 0.0
        %v406 = vadd.f32 %v404, %v405
        %v407 = vsel %vm396, %v190, 0.0
        %v408 = vadd.f32 %v406, %v407
        %v409 = vsel %vm396, %v191, 0.0
        %v410 = vadd.f32 %v408, %v409
        %v411 = vsel %vm396, %v192, 0.0
        %v412 = vadd.f32 %v410, %v411
        %v413 = vsel %vm396, %v193, 0.0
        %v414 = vadd.f32 %v412, %v413
        %v415 = vsel %vm396, %v194, 0.0
        %v416 = vadd.f32 %v414, %v415
        %v417 = vsel %vm396, %v195, 0.0
        %v418 = vadd.f32 %v416, %v417
        %v419 = vsel %vm396, %v196, 0.0
        %v420 = vadd.f32 %v418, %v419
        %v421 = vsel %vm396, %v197, 0.0
        %v422 = vadd.f32 %v420, %v421
        %v423 = vsel %vm396, %v198, 0.0
        %v424 = vadd.f32 %v422, %v423
        %v425 = vsel %vm396, %v199, 0.0
        %v426 = vadd.f32 %v424, %v425
        %v427 = vsel %vm396, %v200, 0.0
        %v428 = vadd.f32 %v426, %v427
        %v429 = vsel %vm396, %v201, 0.0
        %v430 = vadd.f32 %v428, %v429
        %v431 = vsel %vm396, %v202, 0.0
        %v432 = vadd.f32 %v430, %v431
        %v433 = vsel %vm396, %v203, 0.0
        %v434 = vadd.f32 %v432, %v433
        %v435 = vsel %vm396, %v204, 0.0
        %v436 = vadd.f32 %v434, %v435
        %v437 = vsel %vm396, %v205, 0.0
        %v438 = vadd.f32 %v436, %v437
        %v439 = vsel %vm396, %v206, 0.0
        %v440 = vadd.f32 %v438, %v439
        %v441 = vsel %vm396, %v207, 0.0
        %v442 = vadd.f32 %v440, %v441
        %v443 = vsel %vm396, %v208, 0.0
        %v444 = vadd.f32 %v442, %v443
        %v445 = vsel %vm396, %v209, 0.0
        %v446 = vadd.f32 %v444, %v445
        %v447 = vsel %vm396, %v210, 0.0
        %v448 = vadd.f32 %v446, %v447
        %v449 = vsel %vm396, %v211, 0.0
        %v450 = vadd.f32 %v448, %v449
        %v451 = vsel %vm396, %v212, 0.0
        %v452 = vadd.f32 %v450, %v451
        %v453 = vsel %vm396, %v213, 0.0
        %v454 = vadd.f32 %v452, %v453
        %v455 = vsel %vm396, %v214, 0.0
        %v456 = vadd.f32 %v454, %v455
        %v457 = vsel %vm396, %v215, 0.0
        %v458 = vadd.f32 %v456, %v457
        %v459 = vrot.slane %v458, 4
        %v460 = vadd.f32 %v458, %v459
        %v461 = vrot.slane %v460, 2
        %v462 = vadd.f32 %v460, %v461
        %v463 = vrot.slane %v462, 1
        %v464 = vadd.f32 %v462, %v463
        %v465 = vadd.f32 %v403, %v464
        %vm466 = vcmask 286720
        %467 = vst.msk [vmem:[%s161] sm:$0x1] %vm466, %v465
        %p468 = scmp.lt.s32.totalorder %s21, 1
        %s469 = scalar_select %p468, %s21, 1
        %s470 = smul.addr %s469, 5
        %s471 = smul.addr %s470, 8
        %s472 = scalar_lea.vmem %s1, %s471
        %s473 = sand.u32 %s91, 1
        %s474 = scalar_lea.sflag [#allocation3], %s473
        %s475 = sand.u32 %s91, 1
        %s476 = scalar_lea.vmem [#allocation2], %s475
        // Predicated region
        $region29: #{tpu_custom_call.1} parent=23 // pred_check
          %p477 = pneg %p75
        $region30: #{tpu_custom_call.1} parent=23 // pred_check_branch
          %479 = sbr.rel (%p477) target = $region32
        $region31: #{tpu_custom_call.1} parent=23 // pred_region
          _
        $region32: #{tpu_custom_call.1} parent=23 // pred_fallthru
          _
        // Predicated region
        $region33: #{tpu_custom_call.1} parent=23 // pred_check
          %p480 = pneg %p101
        $region34: #{tpu_custom_call.1} parent=23 // pred_check_branch
          %482 = sbr.rel (%p480) target = $region36
        $region35: #{tpu_custom_call.1} parent=23 // pred_region
          %s484 = ssub.s32 16, 16
          %485 = vsyncadd %s474, %s484
          %s486 = smul.addr %s21, 16
          %s487 = scalar_lea.hbm %s2, %s486
          %s489 = sshll.u32 %s476, 4
          %s490 = int_to_ptr.vmem [resolvable:$true] %s489
          %492 = dma.vmem_to_hbm [thread:$0]  %s490, 16, %s487, %s474
        $region36: #{tpu_custom_call.1} parent=23 // pred_fallthru
          _
      $region24: #{tpu_custom_call.1} parent=5 // pred_fallthru
        _
      %p493 = scmp.le.s32.totalorder 2, %s12
      // Predicated region
      $region37: #{tpu_custom_call.1} parent=5 // pred_check
        %p494 = pneg %p493
      $region38: #{tpu_custom_call.1} parent=5 // pred_check_branch
        %496 = sbr.rel (%p494) target = $region40
      $region39: #{tpu_custom_call.1} parent=5 // pred_region
        %s497 = ssub.s32 %s12, 2
        // Predicated region
        $region41: #{tpu_custom_call.1} parent=39 // pred_check
          %p498 = pneg %p81
        $region42: #{tpu_custom_call.1} parent=39 // pred_check_branch
          %500 = sbr.rel (%p498) target = $region44
        $region43: #{tpu_custom_call.1} parent=39 // pred_region
          %p501 = scmp.lt.s32.totalorder %s23, 1
          %s502 = scalar_select %p501, %s23, 1
          %s503 = smul.addr %s502, 5
          %s504 = smul.addr %s503, 8
          %s505 = scalar_lea.vmem %s1, %s504
        $region44: #{tpu_custom_call.1} parent=39 // pred_fallthru
          _
        // Predicated region
        $region45: #{tpu_custom_call.1} parent=39 // pred_check
          %p506 = pneg %p107
        $region46: #{tpu_custom_call.1} parent=39 // pred_check_branch
          %508 = sbr.rel (%p506) target = $region48
        $region47: #{tpu_custom_call.1} parent=39 // pred_region
          %s509 = sand.u32 %s92, 1
          %s510 = scalar_lea.sflag [#allocation3], %s509
          %s511 = sand.u32 %s92, 1
          %s512 = scalar_lea.vmem [#allocation2], %s511
          %513 = dma.done %s510, 16
        $region48: #{tpu_custom_call.1} parent=39 // pred_fallthru
          _
      $region40: #{tpu_custom_call.1} parent=5 // pred_fallthru
        _
    $region6: #{tpu_custom_call.1} parent=1 // loop_footer
      %s16 = sadd.s32 1, %s12
    $region7: #{tpu_custom_call.1} parent=1 // loop_footer_branch
      %11 = sbr.rel target = $region3
    $region8: #{tpu_custom_call.1} parent=1 // loop_exit
      _
    %514 = vsyncpa [#allocation3], 1
    %s515 = scalar_lea.sflag [#allocation3], 1
    %516 = vsyncpa %s515, 1

</llo_original>
